<compile_context>
chip_gen: v7x
topology: tpu7x:2x2x1
jax: 0.10.0
libtpu: 0.0.40
codegen_flags: <defaults>
</compile_context>

<pallas_src>
import jax
import jax.numpy as jnp
from jax.experimental import pallas as pl
from jax.experimental.pallas import tpu as pltpu


def _round_up(n: int, m: int) -> int:
    return ((n + m - 1) // m) * m


def _vmem_limit_bytes() -> int:
    """3/4 of per-core VMEM: ~96 MiB on v5e/v6e (128 MiB), ~48 MiB on v7x (64 MiB)."""
    cap = 128 * 1024 * 1024
    try:
        cap = int(getattr(pltpu.get_tpu_info(), "vmem_capacity_bytes", cap))
    except Exception:
        pass
    return (cap * 3) // 4


def _choose_row_tile(N: int, C: int, itemsize: int, budget_bytes: int) -> int:
    """Rows per grid step: big enough to amortize per-step overhead (~0.35 us),
    small enough for the VMEM budget, and kept to >= 2 grid steps when possible
    so the 'parallel' row axis shards across both v7x TensorCores."""
    if N <= 8:
        return N                                   # one block == full (ragged) row extent
    # 256-align rows only when C is large enough to be MXU-bound (v6e/v7x 256-wide MXU).
    row_align = 256 if (C >= 2048 and C % 256 == 0) else 8
    tile = max(256, budget_bytes // max(1, C * itemsize))
    tile = _round_up(min(tile, N), row_align)
    tile = min(tile, max(row_align, _round_up(pl.cdiv(N, 2), row_align)))
    return max(row_align, tile)


def _choose_channel_tile(C: int):
    for tn in (512, 256, 128):
        if C % tn == 0:
            return tn
    return None


# ---------------------------------------------------------------------------
# Kernels
# ---------------------------------------------------------------------------
def _wr_kernel_resident(x_ref, w_ref, b_ref, o_ref):
    """o = x + (x @ W' + b'); alpha already folded into W'/b'.  W resident in VMEM."""
    x = x_ref[...]                                            # (tile, C), input dtype
    fx = jnp.dot(x.astype(w_ref.dtype), w_ref[...],
                 preferred_element_type=jnp.float32)          # MXU, f32 accumulate
    fx = fx + b_ref[...]                                      # (1, C) f32 bias
    # Epilogue in f32 (v5e VPU has no bf16); x added back at full precision.
    o_ref[...] = (x.astype(jnp.float32) + fx).astype(o_ref.dtype)


def _wr_kernel_channel_tiled(x_ref, xres_ref, w_ref, b_ref, o_ref):
    """(rows, out-channel panel) grid: the full x row block is resident across j
    for the matmul; xres_ref is the matching (tile, tn) x panel for the residual
    add (avoids dynamic lane-offset addressing; its stream hides under MXU time).
    """
    fx = jnp.dot(x_ref[...].astype(w_ref.dtype), w_ref[...],
                 preferred_element_type=jnp.float32)          # (tile, tn)
    fx = fx + b_ref[...]
    o_ref[...] = (xres_ref[...].astype(jnp.float32) + fx).astype(o_ref.dtype)


# ---------------------------------------------------------------------------
# Parameter preparation (do ONCE at load/update time, not per forward call)
# ---------------------------------------------------------------------------
def prepare_weighted_residual_params(w, b, alpha, *, max_alpha=0.2,
                                     clamp_alpha=True, mxu_dtype=jnp.bfloat16):
    """Fold clamp(alpha) into the Linear params:  alpha*(xW + b) == x(W*a) + (b*a).

    w: (C_in, C_out) (transposed vs torch.nn.Linear.weight); b, alpha: (C,).
    Pass mxu_dtype=jnp.float32 for f32 MXU operands (closer to f32 nn.Linear).
    """
    C = w.shape[-1]
    a = alpha.astype(jnp.float32)
    if clamp_alpha:
        a = jnp.clip(a, 0.0, max_alpha)
    w_eff = (w.astype(jnp.float32) * a[None, :]).astype(mxu_dtype)   # scale out-channels
    b_eff = (b.astype(jnp.float32) * a).reshape(1, C)                # f32 bias
    return w_eff, b_eff


# ---------------------------------------------------------------------------
# Hot path
# ---------------------------------------------------------------------------
def weighted_residual_apply(x, w_eff, b_eff, *, channel_tile=None,
                            x_tile_budget_bytes=4 << 20, out_dtype=None):
    """y = x + (x @ w_eff + b_eff), with alpha already folded into w_eff/b_eff."""
    orig_shape = x.shape
    C = orig_shape[-1]
    if w_eff.shape != (C, C) or b_eff.shape != (1, C):
        raise ValueError("w_eff must be (C, C) and b_eff must be (1, C)")
    x2d = x.reshape(-1, C)
    N = x2d.shape[0]
    out_dtype = x.dtype if out_dtype is None else out_dtype

    x_item = jnp.dtype(x.dtype).itemsize
    o_item = jnp.dtype(out_dtype).itemsize
    w_item = jnp.dtype(w_eff.dtype).itemsize
    vmem_limit = _vmem_limit_bytes()

    # Resident-W plan: large streaming row tiles + (single-buffered) resident W.
    tile = _choose_row_tile(N, C, x_item, x_tile_budget_bytes)
    w_bytes = C * C * w_item
    tiles_bytes = 2 * tile * C * (x_item + o_item)       # double-buffered x + out tiles

    use_ctile = channel_tile is not None
    tn = channel_tile
    if not use_ctile and w_bytes + tiles_bytes > (vmem_limit * 4) // 5:
        tn = _choose_channel_tile(C)
        use_ctile = tn is not None
        # TODO(synk): if C is ragged (not a multiple of 128) AND W does not fit the
        # VMEM budget, additionally tile the contraction dim with an f32 accumulator.
    if use_ctile:
        if C % tn != 0:
            raise ValueError("channel_tile must divide channels")
        # W is streamed, so afford a larger resident x row block (fewer W re-reads).
        tile = _choose_row_tile(N, C, x_item, max(x_tile_budget_bytes, vmem_limit // 4))

    cost = pl.CostEstimate(
        flops=2 * N * C * C,
        transcendentals=0,
        bytes_accessed=(N * C * (x_item + o_item) + C * C * w_item + C * 4
                        + (N * C * x_item if use_ctile else 0)))

    if use_ctile:
        grid = (pl.cdiv(N, tile), C // tn)
        out = pl.pallas_call(
            _wr_kernel_channel_tiled,
            out_shape=jax.ShapeDtypeStruct((N, C), out_dtype),
            grid_spec=pltpu.PrefetchScalarGridSpec(
                num_scalar_prefetch=0,
                grid=grid,
                in_specs=[
                    pl.BlockSpec((tile, C), lambda i, j: (i, 0)),    # x rows, resident over j
                    pl.BlockSpec((tile, tn), lambda i, j: (i, j)),   # x panel for residual add
                    pl.BlockSpec((C, tn), lambda i, j: (0, j)),      # W' panel (streamed)
                    pl.BlockSpec((1, tn), lambda i, j: (0, j)),      # b' panel
                ],
                out_specs=pl.BlockSpec((tile, tn), lambda i, j: (i, j))),
            compiler_params=pltpu.CompilerParams(
                dimension_semantics=("parallel", "arbitrary"),
                vmem_limit_bytes=vmem_limit),
            cost_estimate=cost,
        )(x2d, x2d, w_eff, b_eff)
        return out.reshape(orig_shape)

    # Resident-W path.
    def run(single_buffer_w: bool):
        # Constant-index W/b blocks: double buffering buys nothing, so single-buffer
        # them (halves resident-W VMEM; the difference between fitting and OOM on v7x).
        w_kwargs = {"pipeline_mode": pl.Buffered(1)} if single_buffer_w else {}
        return pl.pallas_call(
            _wr_kernel_resident,
            out_shape=jax.ShapeDtypeStruct((N, C), out_dtype),
            grid_spec=pltpu.PrefetchScalarGridSpec(
                num_scalar_prefetch=0,
                grid=(pl.cdiv(N, tile),),
                in_specs=[
                    pl.BlockSpec((tile, C), lambda i: (i, 0)),           # x tile (pipelined)
                    pl.BlockSpec((C, C), lambda i: (0, 0), **w_kwargs),  # W' resident
                    pl.BlockSpec((1, C), lambda i: (0, 0), **w_kwargs),  # b' resident
                ],
                out_specs=pl.BlockSpec((tile, C), lambda i: (i, 0))),
            compiler_params=pltpu.CompilerParams(
                dimension_semantics=("parallel",),
                vmem_limit_bytes=vmem_limit),
            cost_estimate=cost,
        )(x2d, w_eff, b_eff)

    try:
        out = run(single_buffer_w=True)
    except Exception:
        # Fallback for jax versions that reject pipeline_mode / Buffered(1).
        out = run(single_buffer_w=False)
    return out.reshape(orig_shape)


def weighted_residual(x, w, b, alpha, *, max_alpha=0.2, clamp_alpha=True,
                      mxu_dtype=jnp.bfloat16, **apply_kwargs):
    """Convenience one-shot API.  For per-step calls, hoist
    prepare_weighted_residual_params() out of the hot path instead."""
    w_eff, b_eff = prepare_weighted_residual_params(
        w, b, alpha, max_alpha=max_alpha, clamp_alpha=clamp_alpha, mxu_dtype=mxu_dtype)
    return weighted_residual_apply(x, w_eff, b_eff, **apply_kwargs)


if __name__ == "__main__":
    key = jax.random.PRNGKey(0)
    init_alpha, max_alpha = 0.1, 0.2

    def check(batch, seq, channels, *, channel_tile=None):
        kx, kw, kb = jax.random.split(jax.random.fold_in(key, channels), 3)
        x = jax.random.normal(kx, (batch, seq, channels), dtype=jnp.float32)
        # Deterministic "Linear" parameters for fn, stored as (C_in, C_out).
        w = jax.random.normal(kw, (channels, channels), dtype=jnp.float32) * 0.05
        b = jax.random.normal(kb, (channels,), dtype=jnp.float32) * 0.01
        alpha = jnp.full((channels,), init_alpha, dtype=jnp.float32)

        # One-time fold (done at parameter load time, not per forward call).
        w_eff, b_eff = prepare_weighted_residual_params(
            w, b, alpha, max_alpha=max_alpha, clamp_alpha=True)
        y = weighted_residual_apply(x, w_eff, b_eff, channel_tile=channel_tile)
        jax.block_until_ready(y)

        # Pure-JAX f32 reference (kernel uses bf16 MXU operands -> relaxed tolerance).
        a_ref = jnp.clip(alpha, 0.0, max_alpha)
        y_ref = x + (x @ w + b) * a_ref
        assert y.shape == x.shape
        err = float(jnp.max(jnp.abs(y - y_ref)))
        assert jnp.allclose(y, y_ref, atol=1e-2, rtol=1e-2), (channels, err)

    check(2, 8, 128)                     # lane-aligned C, resident-W path
    check(2, 5, 32)                      # ragged rows (N=10) + ragged C, no padding
    check(2, 8, 256, channel_tile=128)   # forced (rows x out-channel-panel) tiled path
    print("KERNEL_OK")
</pallas_src>

<mosaic_0001>
module attributes {stable_mosaic.version = 11 : i64} {
  func.func @_wr_kernel_resident(%arg0: i32, %arg1: memref<8x128xf32, #tpu.memory_space<vmem>>, %arg2: memref<128x128xbf16, #tpu.memory_space<vmem>>, %arg3: memref<1x128xf32, #tpu.memory_space<vmem>>, %arg4: memref<8x128xf32, #tpu.memory_space<vmem>>) attributes {dimension_semantics = [#tpu.dimension_semantics<parallel>], iteration_bounds = array<i64: 2>, scalar_prefetch = 0 : i64, scratch_operands = 0 : i64, tpu.core_type = #tpu.core_type<tc>, window_params = [{transform_indices = @transform_0, window_bounds = array<i64: 8, 128>}, {pipeline_mode = #tpu.pipeline_mode<synchronous>, transform_indices = @transform_1, window_bounds = array<i64: 128, 128>}, {pipeline_mode = #tpu.pipeline_mode<synchronous>, transform_indices = @transform_2, window_bounds = array<i64: 1, 128>}, {transform_indices = @transform_3, window_bounds = array<i64: 8, 128>}]} {
    %c0 = arith.constant 0 : index
    %c0_0 = arith.constant 0 : index
    %0 = vector.load %arg1[%c0, %c0_0] : memref<8x128xf32, #tpu.memory_space<vmem>>, vector<8x128xf32>
    %1 = arith.truncf %0 : vector<8x128xf32> to vector<8x128xbf16>
    %c0_1 = arith.constant 0 : index
    %c0_2 = arith.constant 0 : index
    %2 = vector.load %arg2[%c0_1, %c0_2] : memref<128x128xbf16, #tpu.memory_space<vmem>>, vector<128x128xbf16>
    %cst = arith.constant dense<0.000000e+00> : vector<8x128xf32>
    %3 = tpu.matmul %1, %2, %cst {dimension_numbers = #tpu.dot_dimension_numbers<[1], [0], [0], [1], [0, 0, 1, 1], [], []>} : vector<8x128xbf16>, vector<128x128xbf16>, vector<8x128xf32> -> vector<8x128xf32>
    %c0_3 = arith.constant 0 : index
    %c0_4 = arith.constant 0 : index
    %4 = vector.load %arg3[%c0_3, %c0_4] : memref<1x128xf32, #tpu.memory_space<vmem>>, vector<1x128xf32>
    %5 = vector.broadcast %4 : vector<1x128xf32> to vector<8x128xf32>
    %6 = arith.addf %3, %5 : vector<8x128xf32>
    %7 = arith.addf %0, %6 : vector<8x128xf32>
    %c0_5 = arith.constant 0 : index
    %c0_6 = arith.constant 0 : index
    %8 = vector.load %arg4[%c0_5, %c0_6] : memref<8x128xf32, #tpu.memory_space<vmem>>, vector<8x128xf32>
    tpu.vector_store %arg4[%c0_5, %c0_6], %7 {strides = array<i32>} : memref<8x128xf32, #tpu.memory_space<vmem>>, vector<8x128xf32>,
    return
  }
  func.func @transform_0(%arg0: i32) -> (i32, i32) {
    %c0_i32 = arith.constant 0 : i32
    %c0_i32_0 = arith.constant 0 : i32
    return %arg0, %c0_i32 : i32, i32
  }
  func.func @transform_1(%arg0: i32) -> (i32, i32) {
    %c0_i32 = arith.constant 0 : i32
    %c0_i32_0 = arith.constant 0 : i32
    %c0_i32_1 = arith.constant 0 : i32
    return %c0_i32, %c0_i32_0 : i32, i32
  }
  func.func @transform_2(%arg0: i32) -> (i32, i32) {
    %c0_i32 = arith.constant 0 : i32
    %c0_i32_0 = arith.constant 0 : i32
    %c0_i32_1 = arith.constant 0 : i32
    return %c0_i32, %c0_i32_0 : i32, i32
  }
  func.func @transform_3(%arg0: i32) -> (i32, i32) {
    %c0_i32 = arith.constant 0 : i32
    %c0_i32_0 = arith.constant 0 : i32
    return %arg0, %c0_i32 : i32, i32
  }
}

module attributes {stable_mosaic.version = 11 : i64} {
  func.func @_wr_kernel_resident(%arg0: i32, %arg1: memref<8x128xf32, #tpu.memory_space<vmem>>, %arg2: memref<128x128xbf16, #tpu.memory_space<vmem>>, %arg3: memref<1x128xf32, #tpu.memory_space<vmem>>, %arg4: memref<8x128xf32, #tpu.memory_space<vmem>>) attributes {dimension_semantics = [#tpu.dimension_semantics<parallel>], iteration_bounds = array<i64: 2>, scalar_prefetch = 0 : i64, scratch_operands = 0 : i64, tpu.core_type = #tpu.core_type<tc>, window_params = [{transform_indices = @transform_0, window_bounds = array<i64: 8, 128>}, {pipeline_mode = #tpu.pipeline_mode<synchronous>, transform_indices = @transform_1, window_bounds = array<i64: 128, 128>}, {pipeline_mode = #tpu.pipeline_mode<synchronous>, transform_indices = @transform_2, window_bounds = array<i64: 1, 128>}, {transform_indices = @transform_3, window_bounds = array<i64: 8, 128>}]} {
    %c0 = arith.constant 0 : index
    %c0_0 = arith.constant 0 : index
    %0 = vector.load %arg1[%c0, %c0_0] : memref<8x128xf32, #tpu.memory_space<vmem>>, vector<8x128xf32>
    %1 = arith.truncf %0 : vector<8x128xf32> to vector<8x128xbf16>
    %c0_1 = arith.constant 0 : index
    %c0_2 = arith.constant 0 : index
    %2 = vector.load %arg2[%c0_1, %c0_2] : memref<128x128xbf16, #tpu.memory_space<vmem>>, vector<128x128xbf16>
    %cst = arith.constant dense<0.000000e+00> : vector<8x128xf32>
    %3 = tpu.matmul %1, %2, %cst {dimension_numbers = #tpu.dot_dimension_numbers<[1], [0], [0], [1], [0, 0, 1, 1], [], []>} : vector<8x128xbf16>, vector<128x128xbf16>, vector<8x128xf32> -> vector<8x128xf32>
    %c0_3 = arith.constant 0 : index
    %c0_4 = arith.constant 0 : index
    %4 = vector.load %arg3[%c0_3, %c0_4] : memref<1x128xf32, #tpu.memory_space<vmem>>, vector<1x128xf32>
    %5 = vector.broadcast %4 : vector<1x128xf32> to vector<8x128xf32>
    %6 = arith.addf %3, %5 : vector<8x128xf32>
    %7 = arith.addf %0, %6 : vector<8x128xf32>
    %c0_5 = arith.constant 0 : index
    %c0_6 = arith.constant 0 : index
    %8 = vector.load %arg4[%c0_5, %c0_6] : memref<8x128xf32, #tpu.memory_space<vmem>>, vector<8x128xf32>
    tpu.vector_store %arg4[%c0_5, %c0_6], %7 {strides = array<i32>} : memref<8x128xf32, #tpu.memory_space<vmem>>, vector<8x128xf32>,
    return
  }
  func.func @transform_0(%arg0: i32) -> (i32, i32) {
    %c0_i32 = arith.constant 0 : i32
    %c0_i32_0 = arith.constant 0 : i32
    return %arg0, %c0_i32 : i32, i32
  }
  func.func @transform_1(%arg0: i32) -> (i32, i32) {
    %c0_i32 = arith.constant 0 : i32
    %c0_i32_0 = arith.constant 0 : i32
    %c0_i32_1 = arith.constant 0 : i32
    return %c0_i32, %c0_i32_0 : i32, i32
  }
  func.func @transform_2(%arg0: i32) -> (i32, i32) {
    %c0_i32 = arith.constant 0 : i32
    %c0_i32_0 = arith.constant 0 : i32
    %c0_i32_1 = arith.constant 0 : i32
    return %c0_i32, %c0_i32_0 : i32, i32
  }
  func.func @transform_3(%arg0: i32) -> (i32, i32) {
    %c0_i32 = arith.constant 0 : i32
    %c0_i32_0 = arith.constant 0 : i32
    return %arg0, %c0_i32 : i32, i32
  }
}

</mosaic_0001>

<llo_original>
// kernel: tpu_custom_call.1
$region0: #{tpu_custom_call.1}
  #allocation0 [shape = 'u32[]', space=smem, size = 0x4, offset = 0x4, fixed_abs, tag = 'smem constant byte address 0x4 - core index']
  #allocation1 [shape = 'u32[144,128]{1,0:T(1,128)}', space=vmem, size = 0x12000, scoped, tag = 'internal scratch']
  %s0 = inlined_call_operand.hbm [shape: f32[16,128], index: 0, kind: input, shape index: {}]
  %s1 = inlined_call_operand.hbm [shape: bf16[128,128], index: 1, kind: input, shape index: {}]
  %s2 = inlined_call_operand.hbm [shape: f32[1,128], index: 2, kind: input, shape index: {}]
  %s3 = inlined_call_operand.hbm [shape: f32[16,128], index: 3, kind: output, shape index: {}]
  %s4 = sld [smem:[#allocation0]]
  $region57: #{tpu_custom_call.1} parent=0
    _
  %s6 = ssub.s32 1, %s4
  %s7 = scalar_select 0, %s6, %s4
  $region1: #{tpu_custom_call.1} parent=0
    #allocation2 [shape = 'u8[8192]{0}', space=vmem, size = 0x2000, scoped, tag = 'input window, operand 0']
    #allocation3 [shape = 's32[2]{0}', space=sflag, size = 0x8, scoped, tag = 'scoped memory for tpu_custom_call.1']
    #allocation4 [shape = 's32[2]{0}', space=sflag, size = 0x8, scoped, tag = 'scoped memory for tpu_custom_call.1']
    #allocation5 [shape = 'u8[32768]{0}', space=vmem, size = 0x8000, scoped, tag = 'input window, operand 1, single buffered']
    #allocation6 [shape = 's32[1]{0}', space=sflag, size = 0x4, scoped, tag = 'scoped memory for tpu_custom_call.1']
    #allocation7 [shape = 'u8[512]{0}', space=vmem, size = 0x400, scoped, tag = 'input window, operand 2, single buffered']
    #allocation8 [shape = 'u8[8192]{0}', space=vmem, size = 0x2000, scoped, tag = 'output window, operand 0']
    %8 = vsyncpa [#allocation3], 0
    %s9 = scalar_lea.sflag [#allocation3], 1
    %10 = vsyncpa %s9, 0
    %11 = vsyncpa [#allocation6], 0
    %12 = vsyncpa [#allocation4], 0
    %s13 = scalar_lea.sflag [#allocation4], 1
    %14 = vsyncpa %s13, 0
    loop: start=0, step=1, limit=4
    $region2: #{tpu_custom_call.1} parent=1 // loop_pre_header
      _
    $region3: #{tpu_custom_call.1} parent=1 // loop_header
      %s16 = sphi 0, %s20
      %p17 = scmp.ge.s32.totalorder %s16, 4
      %s26 = sphi 0, %s28
      %s29 = sphi 0, %s26
      %s30 = sphi 0, %s29
      %s46 = sphi 0, %s30
      %s50 = sphi 0, %s50
      %s52 = sphi 0, %s50
      %s53 = sphi 0, %s52
      %s67 = sphi 0, %s53
      %s71 = sphi 0, %s71
      %s73 = sphi 0, %s71
      %s74 = sphi 0, %s73
      %s88 = sphi 0, %s74
      %s94 = sphi 0, %s96
      %s97 = sphi 0, %s94
      %s98 = sphi 0, %s97
      %s114 = sphi 0, %s98
    $region4: #{tpu_custom_call.1} parent=1 // loop_header_branch
      %19 = sbr.rel (%p17) target = $region8
    $region5: #{tpu_custom_call.1} parent=1 // loop_body
      %s21 = ssub.s32 %s16, 1
      %s22 = ssub.s32 %s16, 2
      %s23 = sadd.s32 %s16, 1
      %s24 = ssub.s32 %s16, %s23
      %p25 = scmp.eq.s32.totalorder %s24, 0
      %s27 = sadd.s32 %s26, 1
      %s28 = scalar_select %p25, %s26, %s27
      %p31 = pneg %p25
      %p32 = scmp.eq.s32.totalorder %s16, 1
      %p33 = por %p31, %p32
      %p34 = scmp.ne.s32.totalorder %s26, %s29
      %p35 = scmp.eq.s32.totalorder %s16, 0
      %p36 = por %p34, %p35
      %p37 = scmp.ne.s32.totalorder %s26, %s29
      %p38 = scmp.eq.s32.totalorder %s21, 1
      %p39 = por %p37, %p38
      %p40 = scmp.ne.s32.totalorder %s29, %s30
      %p41 = scmp.eq.s32.totalorder %s21, 0
      %p42 = por %p40, %p41
      %p43 = scmp.ne.s32.totalorder %s29, %s30
      %p44 = scmp.eq.s32.totalorder %s22, 1
      %p45 = por %p43, %p44
      %p47 = scmp.ne.s32.totalorder %s30, %s46
      %p48 = scmp.eq.s32.totalorder %s22, 0
      %p49 = por %p47, %p48
      %s51 = sadd.s32 %s50, 1
      %p54 = scmp.eq.s32.totalorder %s16, 1
      %p55 = scmp.ne.s32.totalorder %s50, %s52
      %p56 = scmp.eq.s32.totalorder %s16, 0
      %p57 = por %p55, %p56
      %p58 = scmp.ne.s32.totalorder %s50, %s52
      %p59 = scmp.eq.s32.totalorder %s21, 1
      %p60 = por %p58, %p59
      %p61 = scmp.ne.s32.totalorder %s52, %s53
      %p62 = scmp.eq.s32.totalorder %s21, 0
      %p63 = por %p61, %p62
      %p64 = scmp.ne.s32.totalorder %s52, %s53
      %p65 = scmp.eq.s32.totalorder %s22, 1
      %p66 = por %p64, %p65
      %p68 = scmp.ne.s32.totalorder %s53, %s67
      %p69 = scmp.eq.s32.totalorder %s22, 0
      %p70 = por %p68, %p69
      %s72 = sadd.s32 %s71, 1
      %p75 = scmp.eq.s32.totalorder %s16, 1
      %p76 = scmp.ne.s32.totalorder %s71, %s73
      %p77 = scmp.eq.s32.totalorder %s16, 0
      %p78 = por %p76, %p77
      %p79 = scmp.ne.s32.totalorder %s71, %s73
      %p80 = scmp.eq.s32.totalorder %s21, 1
      %p81 = por %p79, %p80
      %p82 = scmp.ne.s32.totalorder %s73, %s74
      %p83 = scmp.eq.s32.totalorder %s21, 0
      %p84 = por %p82, %p83
      %p85 = scmp.ne.s32.totalorder %s73, %s74
      %p86 = scmp.eq.s32.totalorder %s22, 1
      %p87 = por %p85, %p86
      %p89 = scmp.ne.s32.totalorder %s74, %s88
      %p90 = scmp.eq.s32.totalorder %s22, 0
      %p91 = por %p89, %p90
      %s92 = ssub.s32 %s16, %s23
      %p93 = scmp.eq.s32.totalorder %s92, 0
      %s95 = sadd.s32 %s94, 1
      %s96 = scalar_select %p93, %s94, %s95
      %p99 = pneg %p93
      %p100 = scmp.eq.s32.totalorder %s16, 1
      %p101 = por %p99, %p100
      %p102 = scmp.ne.s32.totalorder %s94, %s97
      %p103 = scmp.eq.s32.totalorder %s16, 0
      %p104 = por %p102, %p103
      %p105 = scmp.ne.s32.totalorder %s94, %s97
      %p106 = scmp.eq.s32.totalorder %s21, 1
      %p107 = por %p105, %p106
      %p108 = scmp.ne.s32.totalorder %s97, %s98
      %p109 = scmp.eq.s32.totalorder %s21, 0
      %p110 = por %p108, %p109
      %p111 = scmp.ne.s32.totalorder %s97, %s98
      %p112 = scmp.eq.s32.totalorder %s22, 1
      %p113 = por %p111, %p112
      %p115 = scmp.ne.s32.totalorder %s98, %s114
      %p116 = scmp.eq.s32.totalorder %s22, 0
      %p117 = por %p115, %p116
      %p118 = scmp.le.s32.totalorder 1, %s16
      %p119 = scmp.lt.s32.totalorder %s16, 3
      %p120 = pnand %p118, %p119
      %p121 = pneg %p120
      // Predicated region
      $region9: #{tpu_custom_call.1} parent=5 // pred_check
        _
      $region10: #{tpu_custom_call.1} parent=5 // pred_check_branch
        %123 = sbr.rel (%p120) target = $region12
      $region11: #{tpu_custom_call.1} parent=5 // pred_region
        %s124 = ssub.s32 %s16, 1
        // Predicated region
        $region13: #{tpu_custom_call.1} parent=11 // pred_check
          %p125 = pneg %p63
        $region14: #{tpu_custom_call.1} parent=11 // pred_check_branch
          %127 = sbr.rel (%p125) target = $region16
        $region15: #{tpu_custom_call.1} parent=11 // pred_region
          %s129 = ssub.s32 1024, 1024
          %130 = vsyncadd [#allocation6], %s129
          %s131 = sshll.u32 [#allocation5], 4
          %s132 = int_to_ptr.vmem [resolvable:$true] %s131
          %137 = dma.hbm_to_vmem [thread:$0]  %s1, 1024, %s132, [#allocation6], 64, 64, 4
        $region16: #{tpu_custom_call.1} parent=11 // pred_fallthru
          _
        // Predicated region
        $region17: #{tpu_custom_call.1} parent=11 // pred_check
          %p138 = pneg %p84
        $region18: #{tpu_custom_call.1} parent=11 // pred_check_branch
          %140 = sbr.rel (%p138) target = $region20
        $region19: #{tpu_custom_call.1} parent=11 // pred_region
          %s142 = ssub.s32 16, 16
          %143 = vsyncadd [#allocation6], %s142
          %s145 = sshll.u32 [#allocation7], 4
          %s146 = int_to_ptr.vmem [resolvable:$true] %s145
          %148 = dma.hbm_to_vmem [thread:$0]  %s2, 16, %s146, [#allocation6]
        $region20: #{tpu_custom_call.1} parent=11 // pred_fallthru
          _
      $region12: #{tpu_custom_call.1} parent=5 // pred_fallthru
        _
      %p149 = scmp.lt.s32.totalorder %s16, 2
      // Predicated region
      $region21: #{tpu_custom_call.1} parent=5 // pred_check
        %p150 = pneg %p149
      $region22: #{tpu_custom_call.1} parent=5 // pred_check_branch
        %152 = sbr.rel (%p150) target = $region24
      $region23: #{tpu_custom_call.1} parent=5 // pred_region
        // Predicated region
        $region25: #{tpu_custom_call.1} parent=23 // pred_check
          %p153 = pneg %p36
        $region26: #{tpu_custom_call.1} parent=23 // pred_check_branch
          %155 = sbr.rel (%p153) target = $region28
        $region27: #{tpu_custom_call.1} parent=23 // pred_region
          %s156 = sand.u32 %s26, 1
          %s157 = scalar_lea.sflag [#allocation3], %s156
          %s158 = sand.u32 %s26, 1
          %s159 = smul.addr %s158, 8
          %s160 = scalar_lea.vmem [#allocation2], %s159
          %s162 = ssub.s32 128, 128
          %163 = vsyncadd %s157, %s162
          %s164 = smul.addr %s16, 128
          %s165 = scalar_lea.hbm %s0, %s164
          %s167 = sshll.u32 %s160, 4
          %s168 = int_to_ptr.vmem [resolvable:$true] %s167
          %170 = dma.hbm_to_vmem [thread:$0]  %s165, 128, %s168, %s157
        $region28: #{tpu_custom_call.1} parent=23 // pred_fallthru
          _
      $region24: #{tpu_custom_call.1} parent=5 // pred_fallthru
        _
      %p171 = scmp.le.s32.totalorder 1, %s16
      %p172 = scmp.lt.s32.totalorder %s16, 3
      %p173 = pnand %p171, %p172
      %p174 = pneg %p173
      // Predicated region
      $region29: #{tpu_custom_call.1} parent=5 // pred_check
        _
      $region30: #{tpu_custom_call.1} parent=5 // pred_check_branch
        %176 = sbr.rel (%p173) target = $region32
      $region31: #{tpu_custom_call.1} parent=5 // pred_region
        %s177 = ssub.s32 %s16, 1
        %s178 = sand.u32 %s29, 1
        %s179 = scalar_lea.sflag [#allocation3], %s178
        %s180 = sand.u32 %s29, 1
        %s181 = smul.addr %s180, 8
        %s182 = scalar_lea.vmem [#allocation2], %s181
        // Predicated region
        $region33: #{tpu_custom_call.1} parent=31 // pred_check
          %p183 = pneg %p42
        $region34: #{tpu_custom_call.1} parent=31 // pred_check_branch
          %185 = sbr.rel (%p183) target = $region36
        $region35: #{tpu_custom_call.1} parent=31 // pred_region
          %186 = dma.done %s179, 128
        $region36: #{tpu_custom_call.1} parent=31 // pred_fallthru
          _
        // Predicated region
        $region37: #{tpu_custom_call.1} parent=31 // pred_check
          %p187 = pneg %p63
        $region38: #{tpu_custom_call.1} parent=31 // pred_check_branch
          %189 = sbr.rel (%p187) target = $region40
        $region39: #{tpu_custom_call.1} parent=31 // pred_region
          %190 = dma.done [#allocation6], 1024
        $region40: #{tpu_custom_call.1} parent=31 // pred_fallthru
          _
        // Predicated region
        $region41: #{tpu_custom_call.1} parent=31 // pred_check
          %p191 = pneg %p84
        $region42: #{tpu_custom_call.1} parent=31 // pred_check_branch
          %193 = sbr.rel (%p191) target = $region44
        $region43: #{tpu_custom_call.1} parent=31 // pred_region
          %194 = dma.done [#allocation6], 16
        $region44: #{tpu_custom_call.1} parent=31 // pred_fallthru
          _
        %s195 = sand.u32 %s29, 1
        %s196 = scalar_lea.sflag [#allocation3], %s195
        %s197 = sand.u32 %s29, 1
        %s198 = smul.addr %s197, 8
        %s199 = scalar_lea.vmem [#allocation2], %s198
        %p200 = pneg %p42
        %p201 = pneg %p39
        %p202 = pneg %p63
        %p203 = pneg %p60
        %p204 = pneg %p84
        %p205 = pneg %p81
        %p206 = pneg %p110
        %p207 = pneg %p107
        %s208 = sand.u32 %s97, 1
        %s209 = scalar_lea.sflag [#allocation4], %s208
        %s210 = sand.u32 %s97, 1
        %s211 = smul.addr %s210, 8
        %s212 = scalar_lea.vmem [#allocation8], %s211
        %v214 = vld [vmem:[%s182] sm:$0xff]
        %v215 = vpack.c.bf16 %v214, %v214
        %v216 = vld [vmem:[#allocation5] sm:$0xf]
        %v217 = vld [vmem:[#allocation5 + $0x4] sm:$0xf]
        %v218 = vld [vmem:[#allocation5 + $0x8] sm:$0xf]
        %v219 = vld [vmem:[#allocation5 + $0xc] sm:$0xf]
        %v220 = vld [vmem:[#allocation5 + $0x10] sm:$0xf]
        %v221 = vld [vmem:[#allocation5 + $0x14] sm:$0xf]
        %v222 = vld [vmem:[#allocation5 + $0x18] sm:$0xf]
        %v223 = vld [vmem:[#allocation5 + $0x1c] sm:$0xf]
        %v224 = vld [vmem:[#allocation5 + $0x20] sm:$0xf]
        %v225 = vld [vmem:[#allocation5 + $0x24] sm:$0xf]
        %v226 = vld [vmem:[#allocation5 + $0x28] sm:$0xf]
        %v227 = vld [vmem:[#allocation5 + $0x2c] sm:$0xf]
        %v228 = vld [vmem:[#allocation5 + $0x30] sm:$0xf]
        %v229 = vld [vmem:[#allocation5 + $0x34] sm:$0xf]
        %v230 = vld [vmem:[#allocation5 + $0x38] sm:$0xf]
        %v231 = vld [vmem:[#allocation5 + $0x3c] sm:$0xf]
        %v232 = vld [vmem:[#allocation7] sm:$0x1]
        %v234 = vlaneseq
        %v235 = vshrl.u32 %v234, 7
        %v236 = vsub.s32 0, %v235
        %v237 = vrot.slane %v232, %v236
        %v255 = vunpack.c.l.b16 %v216
        %v256 = vunpack.c.l.b16 %v217
        %v257 = vunpack.c.l.b16 %v218
        %v258 = vunpack.c.l.b16 %v219
        %v259 = vunpack.c.l.b16 %v220
        %v260 = vunpack.c.l.b16 %v221
        %v261 = vunpack.c.l.b16 %v222
        %v262 = vunpack.c.l.b16 %v223
        %v263 = vunpack.c.l.b16 %v224
        %v264 = vunpack.c.l.b16 %v225
        %v265 = vunpack.c.l.b16 %v226
        %v266 = vunpack.c.l.b16 %v227
        %v267 = vunpack.c.l.b16 %v228
        %v268 = vunpack.c.l.b16 %v229
        %v269 = vunpack.c.l.b16 %v230
        %v270 = vunpack.c.l.b16 %v231
        %v271 = vpack.c.b16 %v256, %v255
        %v272 = vpack.c.b16 %v258, %v257
        %v273 = vpack.c.b16 %v260, %v259
        %v274 = vpack.c.b16 %v262, %v261
        %v275 = vpack.c.b16 %v264, %v263
        %v276 = vpack.c.b16 %v266, %v265
        %v277 = vpack.c.b16 %v268, %v267
        %v278 = vpack.c.b16 %v270, %v269
        %287 = vmatprep.subr.bf16.mxu0 0
        %288 = vmatpush1.bf16.msra.mxu0 %v271
        %289 = vmatprep.subr.bf16.mxu0 0
        %290 = vmatpush1.bf16.msra.mxu0 %v272
        %291 = vmatprep.subr.bf16.mxu0 0
        %292 = vmatpush1.bf16.msra.mxu0 %v273
        %293 = vmatprep.subr.bf16.mxu0 0
        %294 = vmatpush1.bf16.msra.mxu0 %v274
        %295 = vmatprep.subr.bf16.mxu0 0
        %296 = vmatpush1.bf16.msra.mxu0 %v275
        %297 = vmatprep.subr.bf16.mxu0 0
        %298 = vmatpush1.bf16.msra.mxu0 %v276
        %299 = vmatprep.subr.bf16.mxu0 0
        %300 = vmatpush1.bf16.msra.mxu0 %v277
        %301 = vmatprep.subr.bf16.mxu0 0
        %302 = vmatpush1.bf16.msra.mxu0 %v278
        %303 = vmatprep.subr.bf16.mxu0 0
        %304 = vmatpush1.bf16.msra.mxu0 0
        %305 = vmatprep.subr.bf16.mxu0 0
        %306 = vmatpush1.bf16.msra.mxu0 0
        %307 = vmatprep.subr.bf16.mxu0 0
        %308 = vmatpush1.bf16.msra.mxu0 0
        %309 = vmatprep.subr.bf16.mxu0 0
        %310 = vmatpush1.bf16.msra.mxu0 0
        %311 = vmatprep.subr.bf16.mxu0 0
        %312 = vmatpush1.bf16.msra.mxu0 0
        %313 = vmatprep.subr.bf16.mxu0 0
        %314 = vmatpush1.bf16.msra.mxu0 0
        %315 = vmatprep.subr.bf16.mxu0 0
        %316 = vmatpush1.bf16.msra.mxu0 0
        %317 = vmatprep.subr.bf16.mxu0 0
        %318 = vmatpush1.bf16.msra.mxu0 0
        %319 = vmatprep.mubr.bf16.mxu0 0
        %320 = vmatmul.mubr.bf16.gmra.mrb[0].mxu0 %v215
        %v321 = vpop.f32.mrb[0].mxu0
        %v322 = vadd.f32 %v237, %v321
        %v323 = vpop.f32.mrb[0].mxu0
        %v324 = vpop.f32.mrb[0].mxu0
        %v325 = vpop.f32.mrb[0].mxu0
        %326 = vdwg.mxu0
        %v327 = vadd.f32 %v214, %v322
        %328 = vst [vmem:[%s212] sm:$0xff] %v327
        %s329 = sand.u32 %s97, 1
        %s330 = scalar_lea.sflag [#allocation4], %s329
        %s331 = sand.u32 %s97, 1
        %s332 = smul.addr %s331, 8
        %s333 = scalar_lea.vmem [#allocation8], %s332
        // Predicated region
        $region45: #{tpu_custom_call.1} parent=31 // pred_check
          %p334 = pneg %p107
        $region46: #{tpu_custom_call.1} parent=31 // pred_check_branch
          %336 = sbr.rel (%p334) target = $region48
        $region47: #{tpu_custom_call.1} parent=31 // pred_region
          %s338 = ssub.s32 128, 128
          %339 = vsyncadd %s330, %s338
          %s340 = smul.addr %s21, 128
          %s341 = scalar_lea.hbm %s3, %s340
          %s343 = sshll.u32 %s333, 4
          %s344 = int_to_ptr.vmem [resolvable:$true] %s343
          %346 = dma.vmem_to_hbm [thread:$0]  %s344, 128, %s341, %s330
        $region48: #{tpu_custom_call.1} parent=31 // pred_fallthru
          _
      $region32: #{tpu_custom_call.1} parent=5 // pred_fallthru
        _
      %p347 = scmp.le.s32.totalorder 2, %s16
      // Predicated region
      $region49: #{tpu_custom_call.1} parent=5 // pred_check
        %p348 = pneg %p347
      $region50: #{tpu_custom_call.1} parent=5 // pred_check_branch
        %350 = sbr.rel (%p348) target = $region52
      $region51: #{tpu_custom_call.1} parent=5 // pred_region
        %s351 = ssub.s32 %s16, 2
        // Predicated region
        $region53: #{tpu_custom_call.1} parent=51 // pred_check
          %p352 = pneg %p113
        $region54: #{tpu_custom_call.1} parent=51 // pred_check_branch
          %354 = sbr.rel (%p352) target = $region56
        $region55: #{tpu_custom_call.1} parent=51 // pred_region
          %s355 = sand.u32 %s98, 1
          %s356 = scalar_lea.sflag [#allocation4], %s355
          %s357 = sand.u32 %s98, 1
          %s358 = smul.addr %s357, 8
          %s359 = scalar_lea.vmem [#allocation8], %s358
          %360 = dma.done %s356, 128
        $region56: #{tpu_custom_call.1} parent=51 // pred_fallthru
          _
      $region52: #{tpu_custom_call.1} parent=5 // pred_fallthru
        _
    $region6: #{tpu_custom_call.1} parent=1 // loop_footer
      %s20 = sadd.s32 1, %s16
    $region7: #{tpu_custom_call.1} parent=1 // loop_footer_branch
      %15 = sbr.rel target = $region3
    $region8: #{tpu_custom_call.1} parent=1 // loop_exit
      _
    %361 = vsyncpa [#allocation3], 1
    %s362 = scalar_lea.sflag [#allocation3], 1
    %363 = vsyncpa %s362, 1
    %364 = vsyncpa [#allocation6], 1
    %365 = vsyncpa [#allocation4], 1
    %s366 = scalar_lea.sflag [#allocation4], 1
    %367 = vsyncpa %s366, 1

// kernel: tpu_custom_call.1
$region0: #{tpu_custom_call.1}
  #allocation0 [shape = 'u32[]', space=smem, size = 0x4, offset = 0x4, fixed_abs, tag = 'smem constant byte address 0x4 - core index']
  #allocation1 [shape = 'u32[144,128]{1,0:T(1,128)}', space=vmem, size = 0x12000, scoped, tag = 'internal scratch']
  %s0 = inlined_call_operand.hbm [shape: f32[16,128], index: 0, kind: input, shape index: {}]
  %s1 = inlined_call_operand.hbm [shape: bf16[128,128], index: 1, kind: input, shape index: {}]
  %s2 = inlined_call_operand.hbm [shape: f32[1,128], index: 2, kind: input, shape index: {}]
  %s3 = inlined_call_operand.hbm [shape: f32[16,128], index: 3, kind: output, shape index: {}]
  %s4 = sld [smem:[#allocation0]]
  $region57: #{tpu_custom_call.1} parent=0
    _
  %s6 = ssub.s32 1, %s4
  %s7 = scalar_select 0, %s6, %s4
  $region1: #{tpu_custom_call.1} parent=0
    #allocation2 [shape = 'u8[8192]{0}', space=vmem, size = 0x2000, scoped, tag = 'input window, operand 0']
    #allocation3 [shape = 's32[2]{0}', space=sflag, size = 0x8, scoped, tag = 'scoped memory for tpu_custom_call.1']
    #allocation4 [shape = 's32[2]{0}', space=sflag, size = 0x8, scoped, tag = 'scoped memory for tpu_custom_call.1']
    #allocation5 [shape = 'u8[32768]{0}', space=vmem, size = 0x8000, scoped, tag = 'input window, operand 1, single buffered']
    #allocation6 [shape = 's32[1]{0}', space=sflag, size = 0x4, scoped, tag = 'scoped memory for tpu_custom_call.1']
    #allocation7 [shape = 'u8[512]{0}', space=vmem, size = 0x400, scoped, tag = 'input window, operand 2, single buffered']
    #allocation8 [shape = 'u8[8192]{0}', space=vmem, size = 0x2000, scoped, tag = 'output window, operand 0']
    %8 = vsyncpa [#allocation3], 0
    %s9 = scalar_lea.sflag [#allocation3], 1
    %10 = vsyncpa %s9, 0
    %11 = vsyncpa [#allocation6], 0
    %12 = vsyncpa [#allocation4], 0
    %s13 = scalar_lea.sflag [#allocation4], 1
    %14 = vsyncpa %s13, 0
    loop: start=0, step=1, limit=4
    $region2: #{tpu_custom_call.1} parent=1 // loop_pre_header
      _
    $region3: #{tpu_custom_call.1} parent=1 // loop_header
      %s16 = sphi 0, %s20
      %p17 = scmp.ge.s32.totalorder %s16, 4
      %s26 = sphi 0, %s28
      %s29 = sphi 0, %s26
      %s30 = sphi 0, %s29
      %s46 = sphi 0, %s30
      %s50 = sphi 0, %s50
      %s52 = sphi 0, %s50
      %s53 = sphi 0, %s52
      %s67 = sphi 0, %s53
      %s71 = sphi 0, %s71
      %s73 = sphi 0, %s71
      %s74 = sphi 0, %s73
      %s88 = sphi 0, %s74
      %s94 = sphi 0, %s96
      %s97 = sphi 0, %s94
      %s98 = sphi 0, %s97
      %s114 = sphi 0, %s98
    $region4: #{tpu_custom_call.1} parent=1 // loop_header_branch
      %19 = sbr.rel (%p17) target = $region8
    $region5: #{tpu_custom_call.1} parent=1 // loop_body
      %s21 = ssub.s32 %s16, 1
      %s22 = ssub.s32 %s16, 2
      %s23 = sadd.s32 %s16, 1
      %s24 = ssub.s32 %s16, %s23
      %p25 = scmp.eq.s32.totalorder %s24, 0
      %s27 = sadd.s32 %s26, 1
      %s28 = scalar_select %p25, %s26, %s27
      %p31 = pneg %p25
      %p32 = scmp.eq.s32.totalorder %s16, 1
      %p33 = por %p31, %p32
      %p34 = scmp.ne.s32.totalorder %s26, %s29
      %p35 = scmp.eq.s32.totalorder %s16, 0
      %p36 = por %p34, %p35
      %p37 = scmp.ne.s32.totalorder %s26, %s29
      %p38 = scmp.eq.s32.totalorder %s21, 1
      %p39 = por %p37, %p38
      %p40 = scmp.ne.s32.totalorder %s29, %s30
      %p41 = scmp.eq.s32.totalorder %s21, 0
      %p42 = por %p40, %p41
      %p43 = scmp.ne.s32.totalorder %s29, %s30
      %p44 = scmp.eq.s32.totalorder %s22, 1
      %p45 = por %p43, %p44
      %p47 = scmp.ne.s32.totalorder %s30, %s46
      %p48 = scmp.eq.s32.totalorder %s22, 0
      %p49 = por %p47, %p48
      %s51 = sadd.s32 %s50, 1
      %p54 = scmp.eq.s32.totalorder %s16, 1
      %p55 = scmp.ne.s32.totalorder %s50, %s52
      %p56 = scmp.eq.s32.totalorder %s16, 0
      %p57 = por %p55, %p56
      %p58 = scmp.ne.s32.totalorder %s50, %s52
      %p59 = scmp.eq.s32.totalorder %s21, 1
      %p60 = por %p58, %p59
      %p61 = scmp.ne.s32.totalorder %s52, %s53
      %p62 = scmp.eq.s32.totalorder %s21, 0
      %p63 = por %p61, %p62
      %p64 = scmp.ne.s32.totalorder %s52, %s53
      %p65 = scmp.eq.s32.totalorder %s22, 1
      %p66 = por %p64, %p65
      %p68 = scmp.ne.s32.totalorder %s53, %s67
      %p69 = scmp.eq.s32.totalorder %s22, 0
      %p70 = por %p68, %p69
      %s72 = sadd.s32 %s71, 1
      %p75 = scmp.eq.s32.totalorder %s16, 1
      %p76 = scmp.ne.s32.totalorder %s71, %s73
      %p77 = scmp.eq.s32.totalorder %s16, 0
      %p78 = por %p76, %p77
      %p79 = scmp.ne.s32.totalorder %s71, %s73
      %p80 = scmp.eq.s32.totalorder %s21, 1
      %p81 = por %p79, %p80
      %p82 = scmp.ne.s32.totalorder %s73, %s74
      %p83 = scmp.eq.s32.totalorder %s21, 0
      %p84 = por %p82, %p83
      %p85 = scmp.ne.s32.totalorder %s73, %s74
      %p86 = scmp.eq.s32.totalorder %s22, 1
      %p87 = por %p85, %p86
      %p89 = scmp.ne.s32.totalorder %s74, %s88
      %p90 = scmp.eq.s32.totalorder %s22, 0
      %p91 = por %p89, %p90
      %s92 = ssub.s32 %s16, %s23
      %p93 = scmp.eq.s32.totalorder %s92, 0
      %s95 = sadd.s32 %s94, 1
      %s96 = scalar_select %p93, %s94, %s95
      %p99 = pneg %p93
      %p100 = scmp.eq.s32.totalorder %s16, 1
      %p101 = por %p99, %p100
      %p102 = scmp.ne.s32.totalorder %s94, %s97
      %p103 = scmp.eq.s32.totalorder %s16, 0
      %p104 = por %p102, %p103
      %p105 = scmp.ne.s32.totalorder %s94, %s97
      %p106 = scmp.eq.s32.totalorder %s21, 1
      %p107 = por %p105, %p106
      %p108 = scmp.ne.s32.totalorder %s97, %s98
      %p109 = scmp.eq.s32.totalorder %s21, 0
      %p110 = por %p108, %p109
      %p111 = scmp.ne.s32.totalorder %s97, %s98
      %p112 = scmp.eq.s32.totalorder %s22, 1
      %p113 = por %p111, %p112
      %p115 = scmp.ne.s32.totalorder %s98, %s114
      %p116 = scmp.eq.s32.totalorder %s22, 0
      %p117 = por %p115, %p116
      %p118 = scmp.le.s32.totalorder 1, %s16
      %p119 = scmp.lt.s32.totalorder %s16, 3
      %p120 = pnand %p118, %p119
      %p121 = pneg %p120
      // Predicated region
      $region9: #{tpu_custom_call.1} parent=5 // pred_check
        _
      $region10: #{tpu_custom_call.1} parent=5 // pred_check_branch
        %123 = sbr.rel (%p120) target = $region12
      $region11: #{tpu_custom_call.1} parent=5 // pred_region
        %s124 = ssub.s32 %s16, 1
        // Predicated region
        $region13: #{tpu_custom_call.1} parent=11 // pred_check
          %p125 = pneg %p63
        $region14: #{tpu_custom_call.1} parent=11 // pred_check_branch
          %127 = sbr.rel (%p125) target = $region16
        $region15: #{tpu_custom_call.1} parent=11 // pred_region
          %s129 = ssub.s32 1024, 1024
          %130 = vsyncadd [#allocation6], %s129
          %s131 = sshll.u32 [#allocation5], 4
          %s132 = int_to_ptr.vmem [resolvable:$true] %s131
          %137 = dma.hbm_to_vmem [thread:$0]  %s1, 1024, %s132, [#allocation6], 64, 64, 4
        $region16: #{tpu_custom_call.1} parent=11 // pred_fallthru
          _
        // Predicated region
        $region17: #{tpu_custom_call.1} parent=11 // pred_check
          %p138 = pneg %p84
        $region18: #{tpu_custom_call.1} parent=11 // pred_check_branch
          %140 = sbr.rel (%p138) target = $region20
        $region19: #{tpu_custom_call.1} parent=11 // pred_region
          %s142 = ssub.s32 16, 16
          %143 = vsyncadd [#allocation6], %s142
          %s145 = sshll.u32 [#allocation7], 4
          %s146 = int_to_ptr.vmem [resolvable:$true] %s145
          %148 = dma.hbm_to_vmem [thread:$0]  %s2, 16, %s146, [#allocation6]
        $region20: #{tpu_custom_call.1} parent=11 // pred_fallthru
          _
      $region12: #{tpu_custom_call.1} parent=5 // pred_fallthru
        _
      %p149 = scmp.lt.s32.totalorder %s16, 2
      // Predicated region
      $region21: #{tpu_custom_call.1} parent=5 // pred_check
        %p150 = pneg %p149
      $region22: #{tpu_custom_call.1} parent=5 // pred_check_branch
        %152 = sbr.rel (%p150) target = $region24
      $region23: #{tpu_custom_call.1} parent=5 // pred_region
        // Predicated region
        $region25: #{tpu_custom_call.1} parent=23 // pred_check
          %p153 = pneg %p36
        $region26: #{tpu_custom_call.1} parent=23 // pred_check_branch
          %155 = sbr.rel (%p153) target = $region28
        $region27: #{tpu_custom_call.1} parent=23 // pred_region
          %s156 = sand.u32 %s26, 1
          %s157 = scalar_lea.sflag [#allocation3], %s156
          %s158 = sand.u32 %s26, 1
          %s159 = smul.addr %s158, 8
          %s160 = scalar_lea.vmem [#allocation2], %s159
          %s162 = ssub.s32 128, 128
          %163 = vsyncadd %s157, %s162
          %s164 = smul.addr %s16, 128
          %s165 = scalar_lea.hbm %s0, %s164
          %s167 = sshll.u32 %s160, 4
          %s168 = int_to_ptr.vmem [resolvable:$true] %s167
          %170 = dma.hbm_to_vmem [thread:$0]  %s165, 128, %s168, %s157
        $region28: #{tpu_custom_call.1} parent=23 // pred_fallthru
          _
      $region24: #{tpu_custom_call.1} parent=5 // pred_fallthru
        _
      %p171 = scmp.le.s32.totalorder 1, %s16
      %p172 = scmp.lt.s32.totalorder %s16, 3
      %p173 = pnand %p171, %p172
      %p174 = pneg %p173
      // Predicated region
      $region29: #{tpu_custom_call.1} parent=5 // pred_check
        _
      $region30: #{tpu_custom_call.1} parent=5 // pred_check_branch
        %176 = sbr.rel (%p173) target = $region32
      $region31: #{tpu_custom_call.1} parent=5 // pred_region
        %s177 = ssub.s32 %s16, 1
        %s178 = sand.u32 %s29, 1
        %s179 = scalar_lea.sflag [#allocation3], %s178
        %s180 = sand.u32 %s29, 1
        %s181 = smul.addr %s180, 8
        %s182 = scalar_lea.vmem [#allocation2], %s181
        // Predicated region
        $region33: #{tpu_custom_call.1} parent=31 // pred_check
          %p183 = pneg %p42
        $region34: #{tpu_custom_call.1} parent=31 // pred_check_branch
          %185 = sbr.rel (%p183) target = $region36
        $region35: #{tpu_custom_call.1} parent=31 // pred_region
          %186 = dma.done %s179, 128
        $region36: #{tpu_custom_call.1} parent=31 // pred_fallthru
          _
        // Predicated region
        $region37: #{tpu_custom_call.1} parent=31 // pred_check
          %p187 = pneg %p63
        $region38: #{tpu_custom_call.1} parent=31 // pred_check_branch
          %189 = sbr.rel (%p187) target = $region40
        $region39: #{tpu_custom_call.1} parent=31 // pred_region
          %190 = dma.done [#allocation6], 1024
        $region40: #{tpu_custom_call.1} parent=31 // pred_fallthru
          _
        // Predicated region
        $region41: #{tpu_custom_call.1} parent=31 // pred_check
          %p191 = pneg %p84
        $region42: #{tpu_custom_call.1} parent=31 // pred_check_branch
          %193 = sbr.rel (%p191) target = $region44
        $region43: #{tpu_custom_call.1} parent=31 // pred_region
          %194 = dma.done [#allocation6], 16
        $region44: #{tpu_custom_call.1} parent=31 // pred_fallthru
          _
        %s195 = sand.u32 %s29, 1
        %s196 = scalar_lea.sflag [#allocation3], %s195
        %s197 = sand.u32 %s29, 1
        %s198 = smul.addr %s197, 8
        %s199 = scalar_lea.vmem [#allocation2], %s198
        %p200 = pneg %p42
        %p201 = pneg %p39
        %p202 = pneg %p63
        %p203 = pneg %p60
        %p204 = pneg %p84
        %p205 = pneg %p81
        %p206 = pneg %p110
        %p207 = pneg %p107
        %s208 = sand.u32 %s97, 1
        %s209 = scalar_lea.sflag [#allocation4], %s208
        %s210 = sand.u32 %s97, 1
        %s211 = smul.addr %s210, 8
        %s212 = scalar_lea.vmem [#allocation8], %s211
        %v214 = vld [vmem:[%s182] sm:$0xff]
        %v215 = vpack.c.bf16 %v214, %v214
        %v216 = vld [vmem:[#allocation5] sm:$0xf]
        %v217 = vld [vmem:[#allocation5 + $0x4] sm:$0xf]
        %v218 = vld [vmem:[#allocation5 + $0x8] sm:$0xf]
        %v219 = vld [vmem:[#allocation5 + $0xc] sm:$0xf]
        %v220 = vld [vmem:[#allocation5 + $0x10] sm:$0xf]
        %v221 = vld [vmem:[#allocation5 + $0x14] sm:$0xf]
        %v222 = vld [vmem:[#allocation5 + $0x18] sm:$0xf]
        %v223 = vld [vmem:[#allocation5 + $0x1c] sm:$0xf]
        %v224 = vld [vmem:[#allocation5 + $0x20] sm:$0xf]
        %v225 = vld [vmem:[#allocation5 + $0x24] sm:$0xf]
        %v226 = vld [vmem:[#allocation5 + $0x28] sm:$0xf]
        %v227 = vld [vmem:[#allocation5 + $0x2c] sm:$0xf]
        %v228 = vld [vmem:[#allocation5 + $0x30] sm:$0xf]
        %v229 = vld [vmem:[#allocation5 + $0x34] sm:$0xf]
        %v230 = vld [vmem:[#allocation5 + $0x38] sm:$0xf]
        %v231 = vld [vmem:[#allocation5 + $0x3c] sm:$0xf]
        %v232 = vld [vmem:[#allocation7] sm:$0x1]
        %v234 = vlaneseq
        %v235 = vshrl.u32 %v234, 7
        %v236 = vsub.s32 0, %v235
        %v237 = vrot.slane %v232, %v236
        %v255 = vunpack.c.l.b16 %v216
        %v256 = vunpack.c.l.b16 %v217
        %v257 = vunpack.c.l.b16 %v218
        %v258 = vunpack.c.l.b16 %v219
        %v259 = vunpack.c.l.b16 %v220
        %v260 = vunpack.c.l.b16 %v221
        %v261 = vunpack.c.l.b16 %v222
        %v262 = vunpack.c.l.b16 %v223
        %v263 = vunpack.c.l.b16 %v224
        %v264 = vunpack.c.l.b16 %v225
        %v265 = vunpack.c.l.b16 %v226
        %v266 = vunpack.c.l.b16 %v227
        %v267 = vunpack.c.l.b16 %v228
        %v268 = vunpack.c.l.b16 %v229
        %v269 = vunpack.c.l.b16 %v230
        %v270 = vunpack.c.l.b16 %v231
        %v271 = vpack.c.b16 %v256, %v255
        %v272 = vpack.c.b16 %v258, %v257
        %v273 = vpack.c.b16 %v260, %v259
        %v274 = vpack.c.b16 %v262, %v261
        %v275 = vpack.c.b16 %v264, %v263
        %v276 = vpack.c.b16 %v266, %v265
        %v277 = vpack.c.b16 %v268, %v267
        %v278 = vpack.c.b16 %v270, %v269
        %287 = vmatprep.subr.bf16.mxu0 0
        %288 = vmatpush1.bf16.msra.mxu0 %v271
        %289 = vmatprep.subr.bf16.mxu0 0
        %290 = vmatpush1.bf16.msra.mxu0 %v272
        %291 = vmatprep.subr.bf16.mxu0 0
        %292 = vmatpush1.bf16.msra.mxu0 %v273
        %293 = vmatprep.subr.bf16.mxu0 0
        %294 = vmatpush1.bf16.msra.mxu0 %v274
        %295 = vmatprep.subr.bf16.mxu0 0
        %296 = vmatpush1.bf16.msra.mxu0 %v275
        %297 = vmatprep.subr.bf16.mxu0 0
        %298 = vmatpush1.bf16.msra.mxu0 %v276
        %299 = vmatprep.subr.bf16.mxu0 0
        %300 = vmatpush1.bf16.msra.mxu0 %v277
        %301 = vmatprep.subr.bf16.mxu0 0
        %302 = vmatpush1.bf16.msra.mxu0 %v278
        %303 = vmatprep.subr.bf16.mxu0 0
        %304 = vmatpush1.bf16.msra.mxu0 0
        %305 = vmatprep.subr.bf16.mxu0 0
        %306 = vmatpush1.bf16.msra.mxu0 0
        %307 = vmatprep.subr.bf16.mxu0 0
        %308 = vmatpush1.bf16.msra.mxu0 0
        %309 = vmatprep.subr.bf16.mxu0 0
        %310 = vmatpush1.bf16.msra.mxu0 0
        %311 = vmatprep.subr.bf16.mxu0 0
        %312 = vmatpush1.bf16.msra.mxu0 0
        %313 = vmatprep.subr.bf16.mxu0 0
        %314 = vmatpush1.bf16.msra.mxu0 0
        %315 = vmatprep.subr.bf16.mxu0 0
        %316 = vmatpush1.bf16.msra.mxu0 0
        %317 = vmatprep.subr.bf16.mxu0 0
        %318 = vmatpush1.bf16.msra.mxu0 0
        %319 = vmatprep.mubr.bf16.mxu0 0
        %320 = vmatmul.mubr.bf16.gmra.mrb[0].mxu0 %v215
        %v321 = vpop.f32.mrb[0].mxu0
        %v322 = vadd.f32 %v237, %v321
        %v323 = vpop.f32.mrb[0].mxu0
        %v324 = vpop.f32.mrb[0].mxu0
        %v325 = vpop.f32.mrb[0].mxu0
        %326 = vdwg.mxu0
        %v327 = vadd.f32 %v214, %v322
        %328 = vst [vmem:[%s212] sm:$0xff] %v327
        %s329 = sand.u32 %s97, 1
        %s330 = scalar_lea.sflag [#allocation4], %s329
        %s331 = sand.u32 %s97, 1
        %s332 = smul.addr %s331, 8
        %s333 = scalar_lea.vmem [#allocation8], %s332
        // Predicated region
        $region45: #{tpu_custom_call.1} parent=31 // pred_check
          %p334 = pneg %p107
        $region46: #{tpu_custom_call.1} parent=31 // pred_check_branch
          %336 = sbr.rel (%p334) target = $region48
        $region47: #{tpu_custom_call.1} parent=31 // pred_region
          %s338 = ssub.s32 128, 128
          %339 = vsyncadd %s330, %s338
          %s340 = smul.addr %s21, 128
          %s341 = scalar_lea.hbm %s3, %s340
          %s343 = sshll.u32 %s333, 4
          %s344 = int_to_ptr.vmem [resolvable:$true] %s343
          %346 = dma.vmem_to_hbm [thread:$0]  %s344, 128, %s341, %s330
        $region48: #{tpu_custom_call.1} parent=31 // pred_fallthru
          _
      $region32: #{tpu_custom_call.1} parent=5 // pred_fallthru
        _
      %p347 = scmp.le.s32.totalorder 2, %s16
      // Predicated region
      $region49: #{tpu_custom_call.1} parent=5 // pred_check
        %p348 = pneg %p347
      $region50: #{tpu_custom_call.1} parent=5 // pred_check_branch
        %350 = sbr.rel (%p348) target = $region52
      $region51: #{tpu_custom_call.1} parent=5 // pred_region
        %s351 = ssub.s32 %s16, 2
        // Predicated region
        $region53: #{tpu_custom_call.1} parent=51 // pred_check
          %p352 = pneg %p113
        $region54: #{tpu_custom_call.1} parent=51 // pred_check_branch
          %354 = sbr.rel (%p352) target = $region56
        $region55: #{tpu_custom_call.1} parent=51 // pred_region
          %s355 = sand.u32 %s98, 1
          %s356 = scalar_lea.sflag [#allocation4], %s355
          %s357 = sand.u32 %s98, 1
          %s358 = smul.addr %s357, 8
          %s359 = scalar_lea.vmem [#allocation8], %s358
          %360 = dma.done %s356, 128
        $region56: #{tpu_custom_call.1} parent=51 // pred_fallthru
          _
      $region52: #{tpu_custom_call.1} parent=5 // pred_fallthru
        _
    $region6: #{tpu_custom_call.1} parent=1 // loop_footer
      %s20 = sadd.s32 1, %s16
    $region7: #{tpu_custom_call.1} parent=1 // loop_footer_branch
      %15 = sbr.rel target = $region3
    $region8: #{tpu_custom_call.1} parent=1 // loop_exit
      _
    %361 = vsyncpa [#allocation3], 1
    %s362 = scalar_lea.sflag [#allocation3], 1
    %363 = vsyncpa %s362, 1
    %364 = vsyncpa [#allocation6], 1
    %365 = vsyncpa [#allocation4], 1
    %s366 = scalar_lea.sflag [#allocation4], 1
    %367 = vsyncpa %s366, 1

</llo_original>
